<compile_context>
chip_gen: v7x
topology: tpu7x:2x2x1
jax: 0.10.0
libtpu: 0.0.40
codegen_flags: <defaults>
</compile_context>

<pallas_src>
import functools

import numpy as np
import jax
import jax.numpy as jnp
from jax import lax
from jax.experimental import pallas as pl
from jax.experimental.pallas import tpu as pltpu


_BINOMIAL = {
    1: [1.0],
    2: [1.0, 1.0],
    3: [1.0, 2.0, 1.0],
    4: [1.0, 3.0, 3.0, 1.0],
    5: [1.0, 4.0, 6.0, 4.0, 1.0],
    6: [1.0, 5.0, 10.0, 10.0, 5.0, 1.0],
    7: [1.0, 6.0, 15.0, 20.0, 15.0, 6.0, 1.0],
}


def _downsample_matrix(in_size, out_size, kernel_size, stride, padding):
    """(out_size, in_size) matrix applying the 1-D normalized binomial filter
    with the given stride and zero padding (out-of-range taps contribute 0)."""
    a = np.asarray(_BINOMIAL[kernel_size], dtype=np.float64)
    a = a / a.sum()
    m = np.zeros((out_size, in_size), dtype=np.float64)
    for i in range(out_size):
        for d in range(kernel_size):
            src = stride * i + d - padding
            if 0 <= src < in_size:
                m[i, src] += a[d]
    return m.astype(np.float32)


def _blurpool_kernel(av_ref, ah_ref, x_ref, o_ref):
    # av_ref: (Ho, H)  vertical blur+stride+pad matrix   (VMEM, resident)
    # ah_ref: (W, Wo)  horizontal blur+stride+pad matrix (VMEM, resident)
    # x_ref : (ct, H, W)  input channel planes           (VMEM block)
    # o_ref : (ct, Ho, Wo) output channel planes         (VMEM block)
    av = av_ref[...]
    ah = ah_ref[...]
    ct = x_ref.shape[0]

    def body(c, carry):
        xc = x_ref[c].astype(jnp.float32)                              # (H, W)
        tmp = jnp.dot(xc, ah, preferred_element_type=jnp.float32)      # (H, Wo)
        oc = jnp.dot(av, tmp, preferred_element_type=jnp.float32)      # (Ho, Wo)
        o_ref[c] = oc.astype(o_ref.dtype)
        return carry

    unroll = 2 if (ct > 1 and ct % 2 == 0) else 1
    lax.fori_loop(0, ct, body, 0, unroll=unroll)


def _vmem_limit_bytes():
    """Generation-aware explicit scoped-VMEM limit."""
    try:
        cap = int(pltpu.get_tpu_info().vmem_capacity_bytes)
    except Exception:
        cap = 64 * 1024 * 1024  # conservative (v7x per-TC physical VMEM)
    return int(min(cap * 3 // 4, 96 * 1024 * 1024))


def _pick_channel_tile(nc, h, w, ho, wo, itemsize, budget):
    """Largest channel tile (a divisor of nc) whose pipelined working set fits
    `budget`, capped so the grid keeps >= 4 steps when channels allow."""
    per_chan = 2 * (h * w + ho * wo) * itemsize          # double-buffered in+out blocks
    fixed = 2 * 4 * (ho * h + w * wo)                    # resident constant matrices
    fixed += 4 * (h * w + h * wo + ho * wo)              # in-kernel f32 temporaries
    fixed += 2 * 1024 * 1024                             # slack
    avail = max(budget - fixed, per_chan)
    ct_max = max(1, int(avail // per_chan))
    if nc >= 4:
        ct_max = min(ct_max, max(1, nc // 4))            # >=4 grid steps (v7x megacore)
    elif nc >= 2:
        ct_max = min(ct_max, nc // 2)
    ct = 1
    for d in range(1, ct_max + 1):
        if nc % d == 0:
            ct = d
    return ct


@functools.partial(jax.jit, static_argnames=("kernel_size", "stride", "padding"))
def blur_pool(x, kernel_size=3, stride=2, padding=1):
    """Pallas BlurPool forward.  x: [N, C, H, W] -> [N, C, Ho, Wo]."""
    N, C, H, W = x.shape
    NC = N * C
    Ho = (H + 2 * padding - kernel_size) // stride + 1
    Wo = (W + 2 * padding - kernel_size) // stride + 1
    assert Ho >= 1 and Wo >= 1, "output spatial dims must be positive"

    # Tiny constant matrices folding taps + stride + zero padding (separable).
    av = jnp.asarray(_downsample_matrix(H, Ho, kernel_size, stride, padding))      # (Ho, H)
    ah_t = jnp.asarray(_downsample_matrix(W, Wo, kernel_size, stride, padding).T)  # (W, Wo)

    vmem_limit = _vmem_limit_bytes()
    ct = _pick_channel_tile(NC, H, W, Ho, Wo, x.dtype.itemsize, vmem_limit // 2)
    n_tiles = NC // ct

    xf = x.reshape(NC, H, W)   # leading-dim fold: metadata-only, no HBM pass

    out = pl.pallas_call(
        _blurpool_kernel,
        out_shape=jax.ShapeDtypeStruct((NC, Ho, Wo), x.dtype),
        grid=(n_tiles,),
        in_specs=[
            pl.BlockSpec((Ho, H), lambda i: (0, 0)),        # A_v   (resident)
            pl.BlockSpec((W, Wo), lambda i: (0, 0)),        # A_h^T (resident)
            pl.BlockSpec((ct, H, W), lambda i: (i, 0, 0)),  # input channel planes
        ],
        out_specs=pl.BlockSpec((ct, Ho, Wo), lambda i: (i, 0, 0)),
        compiler_params=pltpu.CompilerParams(
            dimension_semantics=("parallel",),
            vmem_limit_bytes=int(vmem_limit),
        ),
    )(av, ah_t, xf)

    return out.reshape(N, C, Ho, Wo)   # metadata-only reshape back to NCHW


def blur_pool_reference(x, kernel_size=3, stride=2, padding=1):
    """Pure-JAX reference matching F.conv2d(..., stride, padding, groups=C)."""
    N, C, H, W = x.shape
    a = jnp.asarray(_BINOMIAL[kernel_size], dtype=jnp.float32)
    k2 = jnp.outer(a, a)
    k2 = k2 / k2.sum()
    filt = jnp.broadcast_to(k2.astype(x.dtype), (C, 1, kernel_size, kernel_size))
    return lax.conv_general_dilated(
        x, filt,
        window_strides=(stride, stride),
        padding=((padding, padding), (padding, padding)),
        dimension_numbers=("NCHW", "OIHW", "NCHW"),
        feature_group_count=C,
        precision=lax.Precision.HIGHEST,
    )


if __name__ == "__main__":
    key = jax.random.PRNGKey(0)
    N, C, H, W = 2, 4, 16, 16
    x = jax.random.normal(key, (N, C, H, W), dtype=jnp.float32)

    out = jax.block_until_ready(blur_pool(x, kernel_size=3, stride=2, padding=1))
    ref = jax.block_until_ready(blur_pool_reference(x))

    assert out.shape == (N, C, 8, 8), out.shape
    # Tolerance allows for MXU f32 accumulation-order differences vs the conv.
    np.testing.assert_allclose(np.asarray(out), np.asarray(ref), rtol=1e-3, atol=1e-3)

    print("KERNEL_OK")
</pallas_src>

<mosaic_0001>
module attributes {stable_mosaic.version = 11 : i64} {
  func.func @_blurpool_kernel(%arg0: i32, %arg1: memref<8x16xf32, #tpu.memory_space<vmem>>, %arg2: memref<16x8xf32, #tpu.memory_space<vmem>>, %arg3: memref<2x16x16xf32, #tpu.memory_space<vmem>>, %arg4: memref<2x8x8xf32, #tpu.memory_space<vmem>>) attributes {dimension_semantics = [#tpu.dimension_semantics<parallel>], iteration_bounds = array<i64: 4>, scalar_prefetch = 0 : i64, scratch_operands = 0 : i64, tpu.core_type = #tpu.core_type<tc>, window_params = [{pipeline_mode = #tpu.pipeline_mode<synchronous>, transform_indices = @transform_0, window_bounds = array<i64: 8, 16>}, {pipeline_mode = #tpu.pipeline_mode<synchronous>, transform_indices = @transform_1, window_bounds = array<i64: 16, 8>}, {transform_indices = @transform_2, window_bounds = array<i64: 2, 16, 16>}, {transform_indices = @transform_3, window_bounds = array<i64: 2, 8, 8>}]} {
    %c0 = arith.constant 0 : index
    %c0_0 = arith.constant 0 : index
    %0 = vector.load %arg1[%c0, %c0_0] : memref<8x16xf32, #tpu.memory_space<vmem>>, vector<8x16xf32>
    %c0_1 = arith.constant 0 : index
    %c0_2 = arith.constant 0 : index
    %1 = vector.load %arg2[%c0_1, %c0_2] : memref<16x8xf32, #tpu.memory_space<vmem>>, vector<16x8xf32>
    %c0_i32 = arith.constant 0 : i32
    %2 = arith.index_cast %c0_i32 : i32 to index
    %c0_3 = arith.constant 0 : index
    %c0_4 = arith.constant 0 : index
    %3 = vector.load %arg3[%2, %c0_3, %c0_4] : memref<2x16x16xf32, #tpu.memory_space<vmem>>, vector<1x16x16xf32>
    %4 = vector.shape_cast %3 : vector<1x16x16xf32> to vector<16x16xf32>
    %cst = arith.constant dense<0.000000e+00> : vector<16x8xf32>
    %5 = tpu.matmul %4, %1, %cst {dimension_numbers = #tpu.dot_dimension_numbers<[1], [0], [0], [1], [0, 0, 1, 1], [], []>} : vector<16x16xf32>, vector<16x8xf32>, vector<16x8xf32> -> vector<16x8xf32>
    %cst_5 = arith.constant dense<0.000000e+00> : vector<8x8xf32>
    %6 = tpu.matmul %0, %5, %cst_5 {dimension_numbers = #tpu.dot_dimension_numbers<[1], [0], [0], [1], [0, 0, 1, 1], [], []>} : vector<8x16xf32>, vector<16x8xf32>, vector<8x8xf32> -> vector<8x8xf32>
    %7 = arith.index_cast %c0_i32 : i32 to index
    %c0_6 = arith.constant 0 : index
    %c0_7 = arith.constant 0 : index
    %8 = vector.load %arg4[%7, %c0_6, %c0_7] : memref<2x8x8xf32, #tpu.memory_space<vmem>>, vector<1x8x8xf32>
    %9 = vector.shape_cast %8 : vector<1x8x8xf32> to vector<8x8xf32>
    %10 = vector.shape_cast %6 : vector<8x8xf32> to vector<1x8x8xf32>
    tpu.vector_store %arg4[%7, %c0_6, %c0_7], %10 {strides = array<i32>} : memref<2x8x8xf32, #tpu.memory_space<vmem>>, vector<1x8x8xf32>,
    %c1_i32 = arith.constant 1 : i32
    %11 = arith.index_cast %c1_i32 : i32 to index
    %c0_8 = arith.constant 0 : index
    %c0_9 = arith.constant 0 : index
    %12 = vector.load %arg3[%11, %c0_8, %c0_9] : memref<2x16x16xf32, #tpu.memory_space<vmem>>, vector<1x16x16xf32>
    %13 = vector.shape_cast %12 : vector<1x16x16xf32> to vector<16x16xf32>
    %cst_10 = arith.constant dense<0.000000e+00> : vector<16x8xf32>
    %14 = tpu.matmul %13, %1, %cst_10 {dimension_numbers = #tpu.dot_dimension_numbers<[1], [0], [0], [1], [0, 0, 1, 1], [], []>} : vector<16x16xf32>, vector<16x8xf32>, vector<16x8xf32> -> vector<16x8xf32>
    %cst_11 = arith.constant dense<0.000000e+00> : vector<8x8xf32>
    %15 = tpu.matmul %0, %14, %cst_11 {dimension_numbers = #tpu.dot_dimension_numbers<[1], [0], [0], [1], [0, 0, 1, 1], [], []>} : vector<8x16xf32>, vector<16x8xf32>, vector<8x8xf32> -> vector<8x8xf32>
    %16 = arith.index_cast %c1_i32 : i32 to index
    %c0_12 = arith.constant 0 : index
    %c0_13 = arith.constant 0 : index
    %17 = vector.load %arg4[%16, %c0_12, %c0_13] : memref<2x8x8xf32, #tpu.memory_space<vmem>>, vector<1x8x8xf32>
    %18 = vector.shape_cast %17 : vector<1x8x8xf32> to vector<8x8xf32>
    %19 = vector.shape_cast %15 : vector<8x8xf32> to vector<1x8x8xf32>
    tpu.vector_store %arg4[%16, %c0_12, %c0_13], %19 {strides = array<i32>} : memref<2x8x8xf32, #tpu.memory_space<vmem>>, vector<1x8x8xf32>,
    %c2_i32 = arith.constant 2 : i32
    return
  }
  func.func @transform_0(%arg0: i32) -> (i32, i32) {
    %c0_i32 = arith.constant 0 : i32
    %c0_i32_0 = arith.constant 0 : i32
    %c0_i32_1 = arith.constant 0 : i32
    return %c0_i32, %c0_i32_0 : i32, i32
  }
  func.func @transform_1(%arg0: i32) -> (i32, i32) {
    %c0_i32 = arith.constant 0 : i32
    %c0_i32_0 = arith.constant 0 : i32
    %c0_i32_1 = arith.constant 0 : i32
    return %c0_i32, %c0_i32_0 : i32, i32
  }
  func.func @transform_2(%arg0: i32) -> (i32, i32, i32) {
    %c0_i32 = arith.constant 0 : i32
    %c0_i32_0 = arith.constant 0 : i32
    %c0_i32_1 = arith.constant 0 : i32
    return %arg0, %c0_i32, %c0_i32_0 : i32, i32, i32
  }
  func.func @transform_3(%arg0: i32) -> (i32, i32, i32) {
    %c0_i32 = arith.constant 0 : i32
    %c0_i32_0 = arith.constant 0 : i32
    %c0_i32_1 = arith.constant 0 : i32
    return %arg0, %c0_i32, %c0_i32_0 : i32, i32, i32
  }
}

</mosaic_0001>

<llo_original>
// kernel: blur_pool.1
$region0: #{blur_pool.1}
  #allocation0 [shape = 'u32[]', space=smem, size = 0x4, offset = 0x4, fixed_abs, tag = 'smem constant byte address 0x4 - core index']
  #allocation1 [shape = 'u32[144,128]{1,0:T(1,128)}', space=vmem, size = 0x12000, scoped, tag = 'internal scratch']
  %s0 = inlined_call_operand.hbm [shape: f32[8,16], index: 0, kind: input, shape index: {}]
  %s1 = inlined_call_operand.hbm [shape: f32[16,8], index: 1, kind: input, shape index: {}]
  %s2 = inlined_call_operand.hbm [shape: f32[8,16,16], index: 2, kind: input, shape index: {}]
  %s3 = inlined_call_operand.hbm [shape: f32[8,8,8], index: 3, kind: output, shape index: {}]
  %s4 = sld [smem:[#allocation0]]
  $region57: #{blur_pool.1} parent=0
    _
  %s6 = ssub.s32 1, %s4
  %s7 = scalar_select 0, %s6, %s4
  $region1: #{blur_pool.1} parent=0
    #allocation2 [shape = 'u8[4096]{0}', space=vmem, size = 0x1000, scoped, tag = 'input window, operand 0, single buffered']
    #allocation3 [shape = 's32[2]{0}', space=sflag, size = 0x8, scoped, tag = 'scoped memory for blur_pool.1']
    #allocation4 [shape = 's32[2]{0}', space=sflag, size = 0x8, scoped, tag = 'scoped memory for blur_pool.1']
    #allocation5 [shape = 'u8[8192]{0}', space=vmem, size = 0x2000, scoped, tag = 'input window, operand 1, single buffered']
    #allocation6 [shape = 's32[1]{0}', space=sflag, size = 0x4, scoped, tag = 'scoped memory for blur_pool.1']
    #allocation7 [shape = 'u8[32768]{0}', space=vmem, size = 0x8000, scoped, tag = 'input window, operand 2']
    #allocation8 [shape = 'u8[16384]{0}', space=vmem, size = 0x4000, scoped, tag = 'output window, operand 0']
    %8 = vsyncpa [#allocation3], 0
    %9 = vsyncpa [#allocation6], 0
    %10 = vsyncpa [#allocation4], 0
    %s11 = scalar_lea.sflag [#allocation4], 1
    %12 = vsyncpa %s11, 0
    loop: start=0, step=1, limit=6
    $region2: #{blur_pool.1} parent=1 // loop_pre_header
      _
    $region3: #{blur_pool.1} parent=1 // loop_header
      %s14 = sphi 0, %s18
      %p15 = scmp.ge.s32.totalorder %s14, 6
      %s22 = sphi 0, %s22
      %s24 = sphi 0, %s22
      %s25 = sphi 0, %s24
      %s39 = sphi 0, %s25
      %s43 = sphi 0, %s43
      %s45 = sphi 0, %s43
      %s46 = sphi 0, %s45
      %s60 = sphi 0, %s46
      %s66 = sphi 0, %s68
      %s69 = sphi 0, %s66
      %s70 = sphi 0, %s69
      %s86 = sphi 0, %s70
      %s92 = sphi 0, %s94
      %s95 = sphi 0, %s92
      %s96 = sphi 0, %s95
      %s112 = sphi 0, %s96
    $region4: #{blur_pool.1} parent=1 // loop_header_branch
      %17 = sbr.rel (%p15) target = $region8
    $region5: #{blur_pool.1} parent=1 // loop_body
      %s19 = ssub.s32 %s14, 1
      %s20 = ssub.s32 %s14, 2
      %s21 = sadd.s32 %s14, 1
      %s23 = sadd.s32 %s22, 1
      %p26 = scmp.eq.s32.totalorder %s14, 3
      %p27 = scmp.ne.s32.totalorder %s22, %s24
      %p28 = scmp.eq.s32.totalorder %s14, 0
      %p29 = por %p27, %p28
      %p30 = scmp.ne.s32.totalorder %s22, %s24
      %p31 = scmp.eq.s32.totalorder %s19, 3
      %p32 = por %p30, %p31
      %p33 = scmp.ne.s32.totalorder %s24, %s25
      %p34 = scmp.eq.s32.totalorder %s19, 0
      %p35 = por %p33, %p34
      %p36 = scmp.ne.s32.totalorder %s24, %s25
      %p37 = scmp.eq.s32.totalorder %s20, 3
      %p38 = por %p36, %p37
      %p40 = scmp.ne.s32.totalorder %s25, %s39
      %p41 = scmp.eq.s32.totalorder %s20, 0
      %p42 = por %p40, %p41
      %s44 = sadd.s32 %s43, 1
      %p47 = scmp.eq.s32.totalorder %s14, 3
      %p48 = scmp.ne.s32.totalorder %s43, %s45
      %p49 = scmp.eq.s32.totalorder %s14, 0
      %p50 = por %p48, %p49
      %p51 = scmp.ne.s32.totalorder %s43, %s45
      %p52 = scmp.eq.s32.totalorder %s19, 3
      %p53 = por %p51, %p52
      %p54 = scmp.ne.s32.totalorder %s45, %s46
      %p55 = scmp.eq.s32.totalorder %s19, 0
      %p56 = por %p54, %p55
      %p57 = scmp.ne.s32.totalorder %s45, %s46
      %p58 = scmp.eq.s32.totalorder %s20, 3
      %p59 = por %p57, %p58
      %p61 = scmp.ne.s32.totalorder %s46, %s60
      %p62 = scmp.eq.s32.totalorder %s20, 0
      %p63 = por %p61, %p62
      %s64 = ssub.s32 %s14, %s21
      %p65 = scmp.eq.s32.totalorder %s64, 0
      %s67 = sadd.s32 %s66, 1
      %s68 = scalar_select %p65, %s66, %s67
      %p71 = pneg %p65
      %p72 = scmp.eq.s32.totalorder %s14, 3
      %p73 = por %p71, %p72
      %p74 = scmp.ne.s32.totalorder %s66, %s69
      %p75 = scmp.eq.s32.totalorder %s14, 0
      %p76 = por %p74, %p75
      %p77 = scmp.ne.s32.totalorder %s66, %s69
      %p78 = scmp.eq.s32.totalorder %s19, 3
      %p79 = por %p77, %p78
      %p80 = scmp.ne.s32.totalorder %s69, %s70
      %p81 = scmp.eq.s32.totalorder %s19, 0
      %p82 = por %p80, %p81
      %p83 = scmp.ne.s32.totalorder %s69, %s70
      %p84 = scmp.eq.s32.totalorder %s20, 3
      %p85 = por %p83, %p84
      %p87 = scmp.ne.s32.totalorder %s70, %s86
      %p88 = scmp.eq.s32.totalorder %s20, 0
      %p89 = por %p87, %p88
      %s90 = ssub.s32 %s14, %s21
      %p91 = scmp.eq.s32.totalorder %s90, 0
      %s93 = sadd.s32 %s92, 1
      %s94 = scalar_select %p91, %s92, %s93
      %p97 = pneg %p91
      %p98 = scmp.eq.s32.totalorder %s14, 3
      %p99 = por %p97, %p98
      %p100 = scmp.ne.s32.totalorder %s92, %s95
      %p101 = scmp.eq.s32.totalorder %s14, 0
      %p102 = por %p100, %p101
      %p103 = scmp.ne.s32.totalorder %s92, %s95
      %p104 = scmp.eq.s32.totalorder %s19, 3
      %p105 = por %p103, %p104
      %p106 = scmp.ne.s32.totalorder %s95, %s96
      %p107 = scmp.eq.s32.totalorder %s19, 0
      %p108 = por %p106, %p107
      %p109 = scmp.ne.s32.totalorder %s95, %s96
      %p110 = scmp.eq.s32.totalorder %s20, 3
      %p111 = por %p109, %p110
      %p113 = scmp.ne.s32.totalorder %s96, %s112
      %p114 = scmp.eq.s32.totalorder %s20, 0
      %p115 = por %p113, %p114
      %p116 = scmp.le.s32.totalorder 1, %s14
      %p117 = scmp.lt.s32.totalorder %s14, 5
      %p118 = pnand %p116, %p117
      %p119 = pneg %p118
      // Predicated region
      $region9: #{blur_pool.1} parent=5 // pred_check
        _
      $region10: #{blur_pool.1} parent=5 // pred_check_branch
        %121 = sbr.rel (%p118) target = $region12
      $region11: #{blur_pool.1} parent=5 // pred_region
        %s122 = ssub.s32 %s14, 1
        // Predicated region
        $region13: #{blur_pool.1} parent=11 // pred_check
          %p123 = pneg %p35
        $region14: #{blur_pool.1} parent=11 // pred_check_branch
          %125 = sbr.rel (%p123) target = $region16
        $region15: #{blur_pool.1} parent=11 // pred_region
          %s127 = ssub.s32 128, 128
          %128 = vsyncadd [#allocation3], %s127
          %s130 = sshll.u32 [#allocation2], 4
          %s131 = int_to_ptr.vmem [resolvable:$true] %s130
          %133 = dma.hbm_to_vmem [thread:$0]  %s0, 128, %s131, [#allocation3]
        $region16: #{blur_pool.1} parent=11 // pred_fallthru
          _
        // Predicated region
        $region17: #{blur_pool.1} parent=11 // pred_check
          %p134 = pneg %p56
        $region18: #{blur_pool.1} parent=11 // pred_check_branch
          %136 = sbr.rel (%p134) target = $region20
        $region19: #{blur_pool.1} parent=11 // pred_region
          %s138 = ssub.s32 256, 256
          %139 = vsyncadd [#allocation6], %s138
          %s140 = sshll.u32 [#allocation5], 4
          %s141 = int_to_ptr.vmem [resolvable:$true] %s140
          %146 = dma.hbm_to_vmem [thread:$0]  %s1, 256, %s141, [#allocation6], 128, 128, 8
        $region20: #{blur_pool.1} parent=11 // pred_fallthru
          _
      $region12: #{blur_pool.1} parent=5 // pred_fallthru
        _
      %p147 = scmp.lt.s32.totalorder %s14, 4
      // Predicated region
      $region21: #{blur_pool.1} parent=5 // pred_check
        %p148 = pneg %p147
      $region22: #{blur_pool.1} parent=5 // pred_check_branch
        %150 = sbr.rel (%p148) target = $region24
      $region23: #{blur_pool.1} parent=5 // pred_region
        // Predicated region
        $region25: #{blur_pool.1} parent=23 // pred_check
          %p151 = pneg %p76
        $region26: #{blur_pool.1} parent=23 // pred_check_branch
          %153 = sbr.rel (%p151) target = $region28
        $region27: #{blur_pool.1} parent=23 // pred_region
          %s154 = sand.u32 %s14, 1
          %s155 = scalar_lea.sflag [#allocation3], %s154
          %s156 = sand.u32 %s66, 1
          %s157 = smul.addr %s156, 32
          %s158 = scalar_lea.vmem [#allocation7], %s157
          %s159 = smul.u32 2, %s14
          %s161 = ssub.s32 512, 512
          %162 = vsyncadd %s155, %s161
          %s163 = smul.addr %s159, 2
          %s164 = smul.addr %s163, 128
          %s165 = scalar_lea.hbm %s2, %s164
          %s166 = sshll.u32 %s158, 4
          %s167 = int_to_ptr.vmem [resolvable:$true] %s166
          %172 = dma.hbm_to_vmem [thread:$0]  %s165, 512, %s167, %s155, 128, 128, 8
        $region28: #{blur_pool.1} parent=23 // pred_fallthru
          _
      $region24: #{blur_pool.1} parent=5 // pred_fallthru
        _
      %p173 = scmp.le.s32.totalorder 1, %s14
      %p174 = scmp.lt.s32.totalorder %s14, 5
      %p175 = pnand %p173, %p174
      %p176 = pneg %p175
      // Predicated region
      $region29: #{blur_pool.1} parent=5 // pred_check
        _
      $region30: #{blur_pool.1} parent=5 // pred_check_branch
        %178 = sbr.rel (%p175) target = $region32
      $region31: #{blur_pool.1} parent=5 // pred_region
        %s179 = ssub.s32 %s14, 1
        // Predicated region
        $region33: #{blur_pool.1} parent=31 // pred_check
          %p180 = pneg %p35
        $region34: #{blur_pool.1} parent=31 // pred_check_branch
          %182 = sbr.rel (%p180) target = $region36
        $region35: #{blur_pool.1} parent=31 // pred_region
          %183 = dma.done [#allocation3], 128
        $region36: #{blur_pool.1} parent=31 // pred_fallthru
          _
        // Predicated region
        $region37: #{blur_pool.1} parent=31 // pred_check
          %p184 = pneg %p56
        $region38: #{blur_pool.1} parent=31 // pred_check_branch
          %186 = sbr.rel (%p184) target = $region40
        $region39: #{blur_pool.1} parent=31 // pred_region
          %187 = dma.done [#allocation6], 256
        $region40: #{blur_pool.1} parent=31 // pred_fallthru
          _
        %s188 = sand.u32 %s19, 1
        %s189 = scalar_lea.sflag [#allocation3], %s188
        %s190 = sand.u32 %s69, 1
        %s191 = smul.addr %s190, 32
        %s192 = scalar_lea.vmem [#allocation7], %s191
        // Predicated region
        $region41: #{blur_pool.1} parent=31 // pred_check
          %p193 = pneg %p82
        $region42: #{blur_pool.1} parent=31 // pred_check_branch
          %195 = sbr.rel (%p193) target = $region44
        $region43: #{blur_pool.1} parent=31 // pred_region
          %196 = dma.done %s189, 512
        $region44: #{blur_pool.1} parent=31 // pred_fallthru
          _
        %p197 = pneg %p35
        %p198 = pneg %p32
        %p199 = pneg %p56
        %p200 = pneg %p53
        %s201 = sand.u32 %s19, 1
        %s202 = scalar_lea.sflag [#allocation3], %s201
        %s203 = sand.u32 %s69, 1
        %s204 = smul.addr %s203, 32
        %s205 = scalar_lea.vmem [#allocation7], %s204
        %p206 = pneg %p82
        %p207 = pneg %p79
        %p208 = pneg %p108
        %p209 = pneg %p105
        %s210 = sand.u32 %s95, 1
        %s211 = scalar_lea.sflag [#allocation4], %s210
        %s212 = sand.u32 %s95, 1
        %s213 = smul.addr %s212, 16
        %s214 = scalar_lea.vmem [#allocation8], %s213
        %s215 = smul.u32 2, %s19
        %s216 = smul.u32 2, %s19
        %v217 = vld [vmem:[#allocation2] sm:$0xff]
        %v218 = vld [vmem:[#allocation5] sm:$0xff]
        %v219 = vld [vmem:[#allocation5 + $0x8] sm:$0xff]
        %v220 = vld [vmem:[%s192] sm:$0xff]
        %v221 = vld [vmem:[%s192 + $0x8] sm:$0xff]
        %vm222 = vcmask 130048
        %v224 = vsel %vm222, %v220, 0
        %v227 = vsel %vm222, %v221, 0
        %229 = vmatprep.subr.mxu0 0.0
        %230 = vmatpush1.msra.mxu0 %v218
        %231 = vmatprep.subr.mxu0 0.0
        %232 = vmatpush1.msra.mxu0 %v219
        %233 = vmatprep.subr.mxu0 0.0
        %234 = vmatpush1.msra.mxu0 0.0
        %235 = vmatprep.subr.mxu0 0.0
        %236 = vmatpush1.msra.mxu0 0.0
        %237 = vmatprep.subr.mxu0 0.0
        %238 = vmatpush1.msra.mxu0 0.0
        %239 = vmatprep.subr.mxu0 0.0
        %240 = vmatpush1.msra.mxu0 0.0
        %241 = vmatprep.subr.mxu0 0.0
        %242 = vmatpush1.msra.mxu0 0.0
        %243 = vmatprep.subr.mxu0 0.0
        %244 = vmatpush1.msra.mxu0 0.0
        %245 = vmatprep.subr.mxu0 0.0
        %246 = vmatpush1.msra.mxu0 0.0
        %247 = vmatprep.subr.mxu0 0.0
        %248 = vmatpush1.msra.mxu0 0.0
        %249 = vmatprep.subr.mxu0 0.0
        %250 = vmatpush1.msra.mxu0 0.0
        %251 = vmatprep.subr.mxu0 0.0
        %252 = vmatpush1.msra.mxu0 0.0
        %253 = vmatprep.subr.mxu0 0.0
        %254 = vmatpush1.msra.mxu0 0.0
        %255 = vmatprep.subr.mxu0 0.0
        %256 = vmatpush1.msra.mxu0 0.0
        %257 = vmatprep.subr.mxu0 0.0
        %258 = vmatpush1.msra.mxu0 0.0
        %259 = vmatprep.subr.mxu0 0.0
        %260 = vmatpush1.msra.mxu0 0.0
        %261 = vmatprep.subr.mxu0 0.0
        %262 = vmatpush1.msra.mxu0 0.0
        %263 = vmatprep.subr.mxu0 0.0
        %264 = vmatpush1.msra.mxu0 0.0
        %265 = vmatprep.subr.mxu0 0.0
        %266 = vmatpush1.msra.mxu0 0.0
        %267 = vmatprep.subr.mxu0 0.0
        %268 = vmatpush1.msra.mxu0 0.0
        %269 = vmatprep.subr.mxu0 0.0
        %270 = vmatpush1.msra.mxu0 0.0
        %271 = vmatprep.subr.mxu0 0.0
        %272 = vmatpush1.msra.mxu0 0.0
        %273 = vmatprep.subr.mxu0 0.0
        %274 = vmatpush1.msra.mxu0 0.0
        %275 = vmatprep.subr.mxu0 0.0
        %276 = vmatpush1.msra.mxu0 0.0
        %277 = vmatprep.subr.mxu0 0.0
        %278 = vmatpush1.msra.mxu0 0.0
        %279 = vmatprep.subr.mxu0 0.0
        %280 = vmatpush1.msra.mxu0 0.0
        %281 = vmatprep.subr.mxu0 0.0
        %282 = vmatpush1.msra.mxu0 0.0
        %283 = vmatprep.subr.mxu0 0.0
        %284 = vmatpush1.msra.mxu0 0.0
        %285 = vmatprep.subr.mxu0 0.0
        %286 = vmatpush1.msra.mxu0 0.0
        %287 = vmatprep.subr.mxu0 0.0
        %288 = vmatpush1.msra.mxu0 0.0
        %289 = vmatprep.subr.mxu0 0.0
        %290 = vmatpush1.msra.mxu0 0.0
        %291 = vmatprep.subr.mxu0 0.0
        %292 = vmatpush1.msra.mxu0 0.0
        %293 = vmatprep.mubr.f32.mxu0 0.0
        %294 = vmatmul.mubr.f32.gmra.mrb[0].mxu0 %v224
        %v295 = vpop.f32.mrb[0].mxu0
        %v296 = vadd.f32 0.0, %v295
        %v297 = vpop.f32.mrb[0].mxu0
        %298 = vmatprep.mubr.f32.mxu0 0.0
        %299 = vmatmul.mubr.f32.gmra.mrb[0].mxu0 %v227
        %v300 = vpop.f32.mrb[0].mxu0
        %v301 = vadd.f32 0.0, %v300
        %v302 = vpop.f32.mrb[0].mxu0
        %303 = vdwg.mxu0
        %v305 = vsel %vm222, %v217, 0
        %307 = vmatprep.subr.mxu0 0.0
        %308 = vmatpush1.msra.mxu0 %v296
        %309 = vmatprep.subr.mxu0 0.0
        %310 = vmatpush1.msra.mxu0 %v301
        %311 = vmatprep.subr.mxu0 0.0
        %312 = vmatpush1.msra.mxu0 0.0
        %313 = vmatprep.subr.mxu0 0.0
        %314 = vmatpush1.msra.mxu0 0.0
        %315 = vmatprep.subr.mxu0 0.0
        %316 = vmatpush1.msra.mxu0 0.0
        %317 = vmatprep.subr.mxu0 0.0
        %318 = vmatpush1.msra.mxu0 0.0
        %319 = vmatprep.subr.mxu0 0.0
        %320 = vmatpush1.msra.mxu0 0.0
        %321 = vmatprep.subr.mxu0 0.0
        %322 = vmatpush1.msra.mxu0 0.0
        %323 = vmatprep.subr.mxu0 0.0
        %324 = vmatpush1.msra.mxu0 0.0
        %325 = vmatprep.subr.mxu0 0.0
        %326 = vmatpush1.msra.mxu0 0.0
        %327 = vmatprep.subr.mxu0 0.0
        %328 = vmatpush1.msra.mxu0 0.0
        %329 = vmatprep.subr.mxu0 0.0
        %330 = vmatpush1.msra.mxu0 0.0
        %331 = vmatprep.subr.mxu0 0.0
        %332 = vmatpush1.msra.mxu0 0.0
        %333 = vmatprep.subr.mxu0 0.0
        %334 = vmatpush1.msra.mxu0 0.0
        %335 = vmatprep.subr.mxu0 0.0
        %336 = vmatpush1.msra.mxu0 0.0
        %337 = vmatprep.subr.mxu0 0.0
        %338 = vmatpush1.msra.mxu0 0.0
        %339 = vmatprep.subr.mxu0 0.0
        %340 = vmatpush1.msra.mxu0 0.0
        %341 = vmatprep.subr.mxu0 0.0
        %342 = vmatpush1.msra.mxu0 0.0
        %343 = vmatprep.subr.mxu0 0.0
        %344 = vmatpush1.msra.mxu0 0.0
        %345 = vmatprep.subr.mxu0 0.0
        %346 = vmatpush1.msra.mxu0 0.0
        %347 = vmatprep.subr.mxu0 0.0
        %348 = vmatpush1.msra.mxu0 0.0
        %349 = vmatprep.subr.mxu0 0.0
        %350 = vmatpush1.msra.mxu0 0.0
        %351 = vmatprep.subr.mxu0 0.0
        %352 = vmatpush1.msra.mxu0 0.0
        %353 = vmatprep.subr.mxu0 0.0
        %354 = vmatpush1.msra.mxu0 0.0
        %355 = vmatprep.subr.mxu0 0.0
        %356 = vmatpush1.msra.mxu0 0.0
        %357 = vmatprep.subr.mxu0 0.0
        %358 = vmatpush1.msra.mxu0 0.0
        %359 = vmatprep.subr.mxu0 0.0
        %360 = vmatpush1.msra.mxu0 0.0
        %361 = vmatprep.subr.mxu0 0.0
        %362 = vmatpush1.msra.mxu0 0.0
        %363 = vmatprep.subr.mxu0 0.0
        %364 = vmatpush1.msra.mxu0 0.0
        %365 = vmatprep.subr.mxu0 0.0
        %366 = vmatpush1.msra.mxu0 0.0
        %367 = vmatprep.subr.mxu0 0.0
        %368 = vmatpush1.msra.mxu0 0.0
        %369 = vmatprep.subr.mxu0 0.0
        %370 = vmatpush1.msra.mxu0 0.0
        %371 = vmatprep.mubr.f32.mxu0 0.0
        %372 = vmatmul.mubr.f32.gmra.mrb[0].mxu0 %v305
        %v373 = vpop.f32.mrb[0].mxu0
        %v374 = vadd.f32 0.0, %v373
        %v375 = vpop.f32.mrb[0].mxu0
        %376 = vdwg.mxu0
        %vm377 = vcmask 64512
        %378 = vst.msk [vmem:[%s214] sm:$0xff] %vm377, %v374
        %s379 = scalar_lea.vmem %s192, 16 [#allocation7]
        %v380 = vld [vmem:[%s379] sm:$0xff]
        %v381 = vld [vmem:[%s379 + $0x8] sm:$0xff]
        %v383 = vsel %vm222, %v380, 0
        %v386 = vsel %vm222, %v381, 0
        %388 = vmatprep.subr.mxu0 0.0
        %389 = vmatpush1.msra.mxu0 %v218
        %390 = vmatprep.subr.mxu0 0.0
        %391 = vmatpush1.msra.mxu0 %v219
        %392 = vmatprep.subr.mxu0 0.0
        %393 = vmatpush1.msra.mxu0 0.0
        %394 = vmatprep.subr.mxu0 0.0
        %395 = vmatpush1.msra.mxu0 0.0
        %396 = vmatprep.subr.mxu0 0.0
        %397 = vmatpush1.msra.mxu0 0.0
        %398 = vmatprep.subr.mxu0 0.0
        %399 = vmatpush1.msra.mxu0 0.0
        %400 = vmatprep.subr.mxu0 0.0
        %401 = vmatpush1.msra.mxu0 0.0
        %402 = vmatprep.subr.mxu0 0.0
        %403 = vmatpush1.msra.mxu0 0.0
        %404 = vmatprep.subr.mxu0 0.0
        %405 = vmatpush1.msra.mxu0 0.0
        %406 = vmatprep.subr.mxu0 0.0
        %407 = vmatpush1.msra.mxu0 0.0
        %408 = vmatprep.subr.mxu0 0.0
        %409 = vmatpush1.msra.mxu0 0.0
        %410 = vmatprep.subr.mxu0 0.0
        %411 = vmatpush1.msra.mxu0 0.0
        %412 = vmatprep.subr.mxu0 0.0
        %413 = vmatpush1.msra.mxu0 0.0
        %414 = vmatprep.subr.mxu0 0.0
        %415 = vmatpush1.msra.mxu0 0.0
        %416 = vmatprep.subr.mxu0 0.0
        %417 = vmatpush1.msra.mxu0 0.0
        %418 = vmatprep.subr.mxu0 0.0
        %419 = vmatpush1.msra.mxu0 0.0
        %420 = vmatprep.subr.mxu0 0.0
        %421 = vmatpush1.msra.mxu0 0.0
        %422 = vmatprep.subr.mxu0 0.0
        %423 = vmatpush1.msra.mxu0 0.0
        %424 = vmatprep.subr.mxu0 0.0
        %425 = vmatpush1.msra.mxu0 0.0
        %426 = vmatprep.subr.mxu0 0.0
        %427 = vmatpush1.msra.mxu0 0.0
        %428 = vmatprep.subr.mxu0 0.0
        %429 = vmatpush1.msra.mxu0 0.0
        %430 = vmatprep.subr.mxu0 0.0
        %431 = vmatpush1.msra.mxu0 0.0
        %432 = vmatprep.subr.mxu0 0.0
        %433 = vmatpush1.msra.mxu0 0.0
        %434 = vmatprep.subr.mxu0 0.0
        %435 = vmatpush1.msra.mxu0 0.0
        %436 = vmatprep.subr.mxu0 0.0
        %437 = vmatpush1.msra.mxu0 0.0
        %438 = vmatprep.subr.mxu0 0.0
        %439 = vmatpush1.msra.mxu0 0.0
        %440 = vmatprep.subr.mxu0 0.0
        %441 = vmatpush1.msra.mxu0 0.0
        %442 = vmatprep.subr.mxu0 0.0
        %443 = vmatpush1.msra.mxu0 0.0
        %444 = vmatprep.subr.mxu0 0.0
        %445 = vmatpush1.msra.mxu0 0.0
        %446 = vmatprep.subr.mxu0 0.0
        %447 = vmatpush1.msra.mxu0 0.0
        %448 = vmatprep.subr.mxu0 0.0
        %449 = vmatpush1.msra.mxu0 0.0
        %450 = vmatprep.subr.mxu0 0.0
        %451 = vmatpush1.msra.mxu0 0.0
        %452 = vmatprep.mubr.f32.mxu0 0.0
        %453 = vmatmul.mubr.f32.gmra.mrb[0].mxu0 %v383
        %v454 = vpop.f32.mrb[0].mxu0
        %v455 = vadd.f32 0.0, %v454
        %v456 = vpop.f32.mrb[0].mxu0
        %457 = vmatprep.mubr.f32.mxu0 0.0
        %458 = vmatmul.mubr.f32.gmra.mrb[0].mxu0 %v386
        %v459 = vpop.f32.mrb[0].mxu0
        %v460 = vadd.f32 0.0, %v459
        %v461 = vpop.f32.mrb[0].mxu0
        %462 = vdwg.mxu0
        %463 = vmatprep.subr.mxu0 0.0
        %464 = vmatpush1.msra.mxu0 %v455
        %465 = vmatprep.subr.mxu0 0.0
        %466 = vmatpush1.msra.mxu0 %v460
        %467 = vmatprep.subr.mxu0 0.0
        %468 = vmatpush1.msra.mxu0 0.0
        %469 = vmatprep.subr.mxu0 0.0
        %470 = vmatpush1.msra.mxu0 0.0
        %471 = vmatprep.subr.mxu0 0.0
        %472 = vmatpush1.msra.mxu0 0.0
        %473 = vmatprep.subr.mxu0 0.0
        %474 = vmatpush1.msra.mxu0 0.0
        %475 = vmatprep.subr.mxu0 0.0
        %476 = vmatpush1.msra.mxu0 0.0
        %477 = vmatprep.subr.mxu0 0.0
        %478 = vmatpush1.msra.mxu0 0.0
        %479 = vmatprep.subr.mxu0 0.0
        %480 = vmatpush1.msra.mxu0 0.0
        %481 = vmatprep.subr.mxu0 0.0
        %482 = vmatpush1.msra.mxu0 0.0
        %483 = vmatprep.subr.mxu0 0.0
        %484 = vmatpush1.msra.mxu0 0.0
        %485 = vmatprep.subr.mxu0 0.0
        %486 = vmatpush1.msra.mxu0 0.0
        %487 = vmatprep.subr.mxu0 0.0
        %488 = vmatpush1.msra.mxu0 0.0
        %489 = vmatprep.subr.mxu0 0.0
        %490 = vmatpush1.msra.mxu0 0.0
        %491 = vmatprep.subr.mxu0 0.0
        %492 = vmatpush1.msra.mxu0 0.0
        %493 = vmatprep.subr.mxu0 0.0
        %494 = vmatpush1.msra.mxu0 0.0
        %495 = vmatprep.subr.mxu0 0.0
        %496 = vmatpush1.msra.mxu0 0.0
        %497 = vmatprep.subr.mxu0 0.0
        %498 = vmatpush1.msra.mxu0 0.0
        %499 = vmatprep.subr.mxu0 0.0
        %500 = vmatpush1.msra.mxu0 0.0
        %501 = vmatprep.subr.mxu0 0.0
        %502 = vmatpush1.msra.mxu0 0.0
        %503 = vmatprep.subr.mxu0 0.0
        %504 = vmatpush1.msra.mxu0 0.0
        %505 = vmatprep.subr.mxu0 0.0
        %506 = vmatpush1.msra.mxu0 0.0
        %507 = vmatprep.subr.mxu0 0.0
        %508 = vmatpush1.msra.mxu0 0.0
        %509 = vmatprep.subr.mxu0 0.0
        %510 = vmatpush1.msra.mxu0 0.0
        %511 = vmatprep.subr.mxu0 0.0
        %512 = vmatpush1.msra.mxu0 0.0
        %513 = vmatprep.subr.mxu0 0.0
        %514 = vmatpush1.msra.mxu0 0.0
        %515 = vmatprep.subr.mxu0 0.0
        %516 = vmatpush1.msra.mxu0 0.0
        %517 = vmatprep.subr.mxu0 0.0
        %518 = vmatpush1.msra.mxu0 0.0
        %519 = vmatprep.subr.mxu0 0.0
        %520 = vmatpush1.msra.mxu0 0.0
        %521 = vmatprep.subr.mxu0 0.0
        %522 = vmatpush1.msra.mxu0 0.0
        %523 = vmatprep.subr.mxu0 0.0
        %524 = vmatpush1.msra.mxu0 0.0
        %525 = vmatprep.subr.mxu0 0.0
        %526 = vmatpush1.msra.mxu0 0.0
        %527 = vmatprep.mubr.f32.mxu0 0.0
        %528 = vmatmul.mubr.f32.gmra.mrb[0].mxu0 %v305
        %v529 = vpop.f32.mrb[0].mxu0
        %v530 = vadd.f32 0.0, %v529
        %v531 = vpop.f32.mrb[0].mxu0
        %532 = vdwg.mxu0
        %s533 = scalar_lea.vmem %s214, 8 [#allocation8]
        %534 = vst.msk [vmem:[%s533] sm:$0xff] %vm377, %v530
        %s535 = sand.u32 %s95, 1
        %s536 = scalar_lea.sflag [#allocation4], %s535
        %s537 = sand.u32 %s95, 1
        %s538 = smul.addr %s537, 16
        %s539 = scalar_lea.vmem [#allocation8], %s538
        // Predicated region
        $region45: #{blur_pool.1} parent=31 // pred_check
          %p540 = pneg %p105
        $region46: #{blur_pool.1} parent=31 // pred_check_branch
          %542 = sbr.rel (%p540) target = $region48
        $region47: #{blur_pool.1} parent=31 // pred_region
          %s543 = smul.u32 2, %s19
          %s545 = ssub.s32 256, 256
          %546 = vsyncadd %s536, %s545
          %s547 = smul.addr %s543, 128
          %s548 = scalar_lea.hbm %s3, %s547
          %s549 = sshll.u32 %s539, 4
          %s550 = int_to_ptr.vmem [resolvable:$true] %s549
          %555 = dma.vmem_to_hbm [thread:$0]  %s550, 256, %s548, %s536, 128, 128, 8
        $region48: #{blur_pool.1} parent=31 // pred_fallthru
          _
      $region32: #{blur_pool.1} parent=5 // pred_fallthru
        _
      %p556 = scmp.le.s32.totalorder 2, %s14
      // Predicated region
      $region49: #{blur_pool.1} parent=5 // pred_check
        %p557 = pneg %p556
      $region50: #{blur_pool.1} parent=5 // pred_check_branch
        %559 = sbr.rel (%p557) target = $region52
      $region51: #{blur_pool.1} parent=5 // pred_region
        %s560 = ssub.s32 %s14, 2
        // Predicated region
        $region53: #{blur_pool.1} parent=51 // pred_check
          %p561 = pneg %p111
        $region54: #{blur_pool.1} parent=51 // pred_check_branch
          %563 = sbr.rel (%p561) target = $region56
        $region55: #{blur_pool.1} parent=51 // pred_region
          %s564 = sand.u32 %s96, 1
          %s565 = scalar_lea.sflag [#allocation4], %s564
          %s566 = sand.u32 %s96, 1
          %s567 = smul.addr %s566, 16
          %s568 = scalar_lea.vmem [#allocation8], %s567
          %569 = dma.done %s565, 256
        $region56: #{blur_pool.1} parent=51 // pred_fallthru
          _
      $region52: #{blur_pool.1} parent=5 // pred_fallthru
        _
    $region6: #{blur_pool.1} parent=1 // loop_footer
      %s18 = sadd.s32 1, %s14
    $region7: #{blur_pool.1} parent=1 // loop_footer_branch
      %13 = sbr.rel target = $region3
    $region8: #{blur_pool.1} parent=1 // loop_exit
      _
    %570 = vsyncpa [#allocation3], 1
    %s571 = scalar_lea.sflag [#allocation3], 1
    %572 = vsyncpa %s571, 1
    %573 = vsyncpa [#allocation6], 1
    %574 = vsyncpa [#allocation4], 1
    %s575 = scalar_lea.sflag [#allocation4], 1
    %576 = vsyncpa %s575, 1

</llo_original>
